<compile_context>
chip_gen: v7x
topology: tpu7x:2x2x1
jax: 0.10.0
libtpu: 0.0.40
codegen_flags: <defaults>
</compile_context>

<pallas_src>
import functools
from typing import NamedTuple

import jax
import jax.numpy as jnp
from jax.experimental import pallas as pl
from jax.experimental.pallas import tpu as pltpu


def _round_up(n, m):
    return ((n + m - 1) // m) * m


class _FFNConfig(NamedTuple):
    tile_m: int
    tile_h: int
    m_pad: int
    d_in_pad: int
    d_hid_pad: int
    d_out_pad: int
    vmem_limit: int
    compute_dtype: object
    out_dtype: object


@functools.lru_cache(maxsize=1)
def _tpu_hw():
    """(vmem_capacity_bytes, mxu_alignment) for the local TPU, with fallbacks."""
    kind = ""
    try:
        kind = jax.devices()[0].device_kind.lower()
    except Exception:
        pass
    vmem = None
    try:
        vmem = int(pltpu.get_tpu_info().vmem_capacity_bytes)
    except Exception:
        vmem = None
    if not vmem or vmem <= 0:
        vmem = (64 << 20) if "v7" in kind else (128 << 20)
    # 128x128 MXU on <=v5 generations, 256x256 on v6e/v7x.
    align = 128 if any(t in kind for t in ("v2", "v3", "v4", "v5")) else 256
    return vmem, align


def _ffn_kernel(x_ref, w1_ref, b1_ref, w2_ref, b2_ref, o_ref, xq_ref, acc_ref):
    # Grid: (row_tiles, hidden_tiles); hidden axis is the reduction axis.
    h_idx = pl.program_id(1)

    @pl.when(h_idx == 0)
    def _():
        # Cast the activation row tile to the MXU compute dtype ONCE per row
        # tile (VPU work, hidden next to the MXU) and zero the accumulator.
        xq_ref[...] = x_ref[...].astype(xq_ref.dtype)
        acc_ref[...] = jnp.zeros_like(acc_ref)

    # dense1 slab + bias + ReLU in f32, then dense2 slab accumulated in f32.
    h = jnp.dot(xq_ref[...], w1_ref[...], preferred_element_type=jnp.float32)
    h = jnp.maximum(h + b1_ref[...], 0.0)
    acc_ref[...] += jnp.dot(h.astype(w2_ref.dtype), w2_ref[...],
                            preferred_element_type=jnp.float32)

    @pl.when(h_idx == pl.num_programs(1) - 1)
    def _():
        o_ref[...] = (acc_ref[...] + b2_ref[...]).astype(o_ref.dtype)


def _make_config(M, d_in, d_hidden, d_out, x_dtype, compute_dtype, out_dtype,
                 tile_m, tile_h):
    vmem, align = _tpu_hw()
    d_in_p = _round_up(d_in, align)
    d_hid_p = _round_up(d_hidden, align)
    d_out_p = _round_up(d_out, align)

    xbytes = jnp.dtype(x_dtype).itemsize
    cbytes = jnp.dtype(compute_dtype).itemsize
    obytes = jnp.dtype(out_dtype).itemsize

    budget = int(vmem * 0.8)

    th = 512 if tile_h is None else int(tile_h)
    th = min(_round_up(max(th, align), align), d_hid_p)

    tm = (1024 if vmem >= (100 << 20) else 512) if tile_m is None else int(tile_m)
    tm = max(16, _round_up(min(tm, _round_up(M, 16)), 16))

    def need(tm_, th_):
        return (2 * tm_ * d_in_p * xbytes          # x tile (input dtype), double-buffered
                + tm_ * d_in_p * cbytes            # casted x scratch
                + 2 * d_in_p * th_ * cbytes        # w1 slab, double-buffered
                + 2 * th_ * d_out_p * cbytes       # w2 slab, double-buffered
                + 2 * (th_ + d_out_p) * 4          # bias slabs
                + tm_ * d_out_p * 4                # f32 accumulator scratch
                + 2 * tm_ * d_out_p * obytes       # output tile, double-buffered
                + tm_ * th_ * (4 + cbytes)         # hidden slab (f32 + cast copy)
                + (2 << 20))                       # slack

    # Shrink row tile, then hidden slab, then row tile again to fit the budget.
    while need(tm, th) > budget and tm > 128:
        tm = max(128, _round_up(tm // 2, 16))
    while need(tm, th) > budget and th > align:
        th = max(align, _round_up(th // 2, align))
    while need(tm, th) > budget and tm > 16:
        tm = max(16, _round_up(tm // 2, 16))

    # Give megacore (v7x: 2 TCs) something to shard: aim for >= 2 row tiles.
    while M >= 32 and pl.cdiv(M, tm) < 2 and tm >= 32:
        tm = max(16, _round_up(tm // 2, 16))

    m_pad = _round_up(M, tm)
    d_hid_p = _round_up(d_hid_p, th)

    vmem_limit = int(max(32 << 20, min(int(vmem * 0.85), need(tm, th) + (16 << 20))))

    return _FFNConfig(tile_m=tm, tile_h=th, m_pad=m_pad, d_in_pad=d_in_p,
                      d_hid_pad=d_hid_p, d_out_pad=d_out_p,
                      vmem_limit=vmem_limit, compute_dtype=compute_dtype,
                      out_dtype=out_dtype)


@functools.partial(jax.jit, static_argnums=(5,))
def _ffn_impl(x2, w1, b1, w2, b2, cfg: _FFNConfig):
    M, d_in = x2.shape
    d_hidden = w1.shape[1]
    d_out = w2.shape[1]
    tm, th = cfg.tile_m, cfg.tile_h
    M_p, d_in_p = cfg.m_pad, cfg.d_in_pad
    d_hid_p, d_out_p = cfg.d_hid_pad, cfg.d_out_pad
    cdt = cfg.compute_dtype
    cbytes = jnp.dtype(cdt).itemsize

    # Zero padding is mathematically inert: extra d_in cols multiply zero rows
    # of w1, extra hidden cols give ReLU(0+0)=0 against zero rows of w2, and
    # extra rows / d_out cols are sliced off after the call.
    x_p = jnp.pad(x2, ((0, M_p - M), (0, d_in_p - d_in)))
    w1_p = jnp.pad(w1.astype(cdt), ((0, d_in_p - d_in), (0, d_hid_p - d_hidden)))
    w2_p = jnp.pad(w2.astype(cdt), ((0, d_hid_p - d_hidden), (0, d_out_p - d_out)))
    b1_p = jnp.pad(b1.astype(jnp.float32).reshape(1, -1),
                   ((0, 0), (0, d_hid_p - d_hidden)))
    b2_p = jnp.pad(b2.astype(jnp.float32).reshape(1, -1),
                   ((0, 0), (0, d_out_p - d_out)))

    n_m = M_p // tm
    n_h = d_hid_p // th

    flops = 2 * M_p * (d_in_p * d_hid_p + d_hid_p * d_out_p)
    bytes_accessed = (M_p * d_in_p * x_p.dtype.itemsize
                      + n_m * (d_in_p * d_hid_p + d_hid_p * d_out_p) * cbytes
                      + (d_hid_p + d_out_p) * 4
                      + M_p * d_out_p * jnp.dtype(cfg.out_dtype).itemsize)

    out = pl.pallas_call(
        _ffn_kernel,
        out_shape=jax.ShapeDtypeStruct((M_p, d_out_p), cfg.out_dtype),
        grid_spec=pltpu.PrefetchScalarGridSpec(
            num_scalar_prefetch=0,
            grid=(n_m, n_h),
            in_specs=[
                pl.BlockSpec((tm, d_in_p), lambda i, h: (i, 0)),    # x row tile
                pl.BlockSpec((d_in_p, th), lambda i, h: (0, h)),    # w1 slab
                pl.BlockSpec((1, th), lambda i, h: (0, h)),         # b1 slab
                pl.BlockSpec((th, d_out_p), lambda i, h: (h, 0)),   # w2 slab
                pl.BlockSpec((1, d_out_p), lambda i, h: (0, 0)),    # b2
            ],
            out_specs=pl.BlockSpec((tm, d_out_p), lambda i, h: (i, 0)),
            scratch_shapes=[
                pltpu.VMEM((tm, d_in_p), cdt),           # bf16 copy of x tile
                pltpu.VMEM((tm, d_out_p), jnp.float32),  # f32 accumulator
            ]),
        compiler_params=pltpu.CompilerParams(
            dimension_semantics=("parallel", "arbitrary"),
            vmem_limit_bytes=cfg.vmem_limit),
        cost_estimate=pl.CostEstimate(flops=int(flops), transcendentals=0,
                                      bytes_accessed=int(bytes_accessed)),
    )(x_p, w1_p, b1_p, w2_p, b2_p)

    return out[:M, :d_out]


def position_wise_ffn(x, w1, b1, w2, b2, *, compute_dtype=jnp.bfloat16,
                      out_dtype=None, tile_m=None, tile_h=None):
    """x: (..., d_in) -> (..., d_out); fused Linear -> ReLU -> Linear.

    Weights are pre-transposed: w1 (d_in, d_hidden), w2 (d_hidden, d_out).
    """
    *lead, d_in = x.shape
    d_hidden = w1.shape[1]
    d_out = w2.shape[1]
    if out_dtype is None:
        out_dtype = x.dtype
    M = 1
    for s in lead:
        M *= int(s)

    cfg = _make_config(M, d_in, d_hidden, d_out, x.dtype, compute_dtype,
                       jnp.dtype(out_dtype), tile_m, tile_h)
    out2 = _ffn_impl(x.reshape(M, d_in), w1, b1, w2, b2, cfg)
    return out2.reshape(*lead, d_out)


def _init_linear_params(key, fan_in, fan_out, dtype=jnp.float32):
    """nn.Linear-style U(-1/sqrt(fan_in), 1/sqrt(fan_in)); weight pre-transposed."""
    kw, kb = jax.random.split(key)
    bound = 1.0 / (fan_in ** 0.5)
    w = jax.random.uniform(kw, (fan_in, fan_out), dtype, -bound, bound)
    b = jax.random.uniform(kb, (fan_out,), dtype, -bound, bound)
    return w, b


if __name__ == "__main__":
    batch, seq = 2, 64
    ffn_num_input, ffn_num_hiddens, ffn_num_outputs = 32, 64, 32

    key = jax.random.PRNGKey(0)
    kx, k1, k2 = jax.random.split(key, 3)

    x = jax.random.normal(kx, (batch, seq, ffn_num_input), jnp.float32)
    w1, b1 = _init_linear_params(k1, ffn_num_input, ffn_num_hiddens)
    w2, b2 = _init_linear_params(k2, ffn_num_hiddens, ffn_num_outputs)

    out = position_wise_ffn(x, w1, b1, w2, b2)
    out = jax.block_until_ready(out)
    assert out.shape == (batch, seq, ffn_num_outputs)
    assert out.dtype == x.dtype

    # Reference on the same bf16-MXU / f32-accumulation path as the kernel.
    xb = x.astype(jnp.bfloat16).reshape(-1, ffn_num_input)
    h_ref = jnp.dot(xb, w1.astype(jnp.bfloat16),
                    preferred_element_type=jnp.float32) + b1
    h_ref = jnp.maximum(h_ref, 0.0)
    ref = jnp.dot(h_ref.astype(jnp.bfloat16), w2.astype(jnp.bfloat16),
                  preferred_element_type=jnp.float32) + b2
    ref = ref.reshape(batch, seq, ffn_num_outputs)
    assert jnp.allclose(out.astype(jnp.float32), ref, atol=2e-3, rtol=2e-3), \
        "mismatch vs bf16-path reference"

    # Loose check against the pure-f32 math of the PyTorch module.
    ref_f32 = jnp.maximum(x @ w1 + b1, 0.0) @ w2 + b2
    assert jnp.allclose(out, ref_f32, atol=5e-2, rtol=5e-2), \
        "mismatch vs f32 reference"

    print("KERNEL_OK")
</pallas_src>

<mosaic_0001>
module attributes {stable_mosaic.version = 11 : i64} {
  func.func @_ffn_kernel(%arg0: i32, %arg1: i32, %arg2: memref<64x256xf32, #tpu.memory_space<vmem>>, %arg3: memref<256x256xbf16, #tpu.memory_space<vmem>>, %arg4: memref<1x256xf32, #tpu.memory_space<vmem>>, %arg5: memref<256x256xbf16, #tpu.memory_space<vmem>>, %arg6: memref<1x256xf32, #tpu.memory_space<vmem>>, %arg7: memref<64x256xf32, #tpu.memory_space<vmem>>, %arg8: memref<64x256xbf16, #tpu.memory_space<vmem>>, %arg9: memref<64x256xf32, #tpu.memory_space<vmem>>) attributes {dimension_semantics = [#tpu.dimension_semantics<parallel>, #tpu.dimension_semantics<arbitrary>], iteration_bounds = array<i64: 2, 1>, scalar_prefetch = 0 : i64, scratch_operands = 2 : i64, tpu.core_type = #tpu.core_type<tc>, window_params = [{transform_indices = @transform_0, window_bounds = array<i64: 64, 256>}, {transform_indices = @transform_1, window_bounds = array<i64: 256, 256>}, {transform_indices = @transform_2, window_bounds = array<i64: 1, 256>}, {transform_indices = @transform_3, window_bounds = array<i64: 256, 256>}, {pipeline_mode = #tpu.pipeline_mode<synchronous>, transform_indices = @transform_4, window_bounds = array<i64: 1, 256>}, {transform_indices = @transform_5, window_bounds = array<i64: 64, 256>}]} {
    %c0_i32 = arith.constant 0 : i32
    %0 = arith.cmpi eq, %arg1, %c0_i32 : i32
    %1 = arith.extui %0 : i1 to i32
    %c0_i32_0 = arith.constant 0 : i32
    %2 = arith.cmpi ne, %1, %c0_i32_0 : i32
    scf.if %2 {
      %c0_16 = arith.constant 0 : index
      %c0_17 = arith.constant 0 : index
      %20 = vector.load %arg2[%c0_16, %c0_17] : memref<64x256xf32, #tpu.memory_space<vmem>>, vector<64x256xf32>
      %21 = arith.truncf %20 : vector<64x256xf32> to vector<64x256xbf16>
      %c0_18 = arith.constant 0 : index
      %c0_19 = arith.constant 0 : index
      %22 = vector.load %arg8[%c0_18, %c0_19] : memref<64x256xbf16, #tpu.memory_space<vmem>>, vector<64x256xbf16>
      tpu.vector_store %arg8[%c0_18, %c0_19], %21 {strides = array<i32>} : memref<64x256xbf16, #tpu.memory_space<vmem>>, vector<64x256xbf16>,
      %cst_20 = arith.constant 0.000000e+00 : f32
      %23 = vector.broadcast %cst_20 : f32 to vector<64x256xf32>
      %c0_21 = arith.constant 0 : index
      %c0_22 = arith.constant 0 : index
      %24 = vector.load %arg9[%c0_21, %c0_22] : memref<64x256xf32, #tpu.memory_space<vmem>>, vector<64x256xf32>
      tpu.vector_store %arg9[%c0_21, %c0_22], %23 {strides = array<i32>} : memref<64x256xf32, #tpu.memory_space<vmem>>, vector<64x256xf32>,
    } else {
    }
    %c0 = arith.constant 0 : index
    %c0_1 = arith.constant 0 : index
    %3 = vector.load %arg8[%c0, %c0_1] : memref<64x256xbf16, #tpu.memory_space<vmem>>, vector<64x256xbf16>
    %c0_2 = arith.constant 0 : index
    %c0_3 = arith.constant 0 : index
    %4 = vector.load %arg3[%c0_2, %c0_3] : memref<256x256xbf16, #tpu.memory_space<vmem>>, vector<256x256xbf16>
    %cst = arith.constant dense<0.000000e+00> : vector<64x256xf32>
    %5 = tpu.matmul %3, %4, %cst {dimension_numbers = #tpu.dot_dimension_numbers<[1], [0], [0], [1], [0, 0, 1, 1], [], []>} : vector<64x256xbf16>, vector<256x256xbf16>, vector<64x256xf32> -> vector<64x256xf32>
    %c0_4 = arith.constant 0 : index
    %c0_5 = arith.constant 0 : index
    %6 = vector.load %arg4[%c0_4, %c0_5] : memref<1x256xf32, #tpu.memory_space<vmem>>, vector<1x256xf32>
    %7 = vector.broadcast %6 : vector<1x256xf32> to vector<64x256xf32>
    %8 = arith.addf %5, %7 : vector<64x256xf32>
    %cst_6 = arith.constant 0.000000e+00 : f32
    %9 = vector.broadcast %cst_6 : f32 to vector<64x256xf32>
    %10 = arith.maximumf %8, %9 : vector<64x256xf32>
    %c0_7 = arith.constant 0 : index
    %c0_8 = arith.constant 0 : index
    %11 = vector.load %arg9[%c0_7, %c0_8] : memref<64x256xf32, #tpu.memory_space<vmem>>, vector<64x256xf32>
    %12 = arith.truncf %10 : vector<64x256xf32> to vector<64x256xbf16>
    %c0_9 = arith.constant 0 : index
    %c0_10 = arith.constant 0 : index
    %13 = vector.load %arg5[%c0_9, %c0_10] : memref<256x256xbf16, #tpu.memory_space<vmem>>, vector<256x256xbf16>
    %cst_11 = arith.constant dense<0.000000e+00> : vector<64x256xf32>
    %14 = tpu.matmul %12, %13, %cst_11 {dimension_numbers = #tpu.dot_dimension_numbers<[1], [0], [0], [1], [0, 0, 1, 1], [], []>} : vector<64x256xbf16>, vector<256x256xbf16>, vector<64x256xf32> -> vector<64x256xf32>
    %15 = arith.addf %11, %14 : vector<64x256xf32>
    %c0_12 = arith.constant 0 : index
    %c0_13 = arith.constant 0 : index
    %16 = vector.load %arg9[%c0_12, %c0_13] : memref<64x256xf32, #tpu.memory_space<vmem>>, vector<64x256xf32>
    tpu.vector_store %arg9[%c0_12, %c0_13], %15 {strides = array<i32>} : memref<64x256xf32, #tpu.memory_space<vmem>>, vector<64x256xf32>,
    %c0_i32_14 = arith.constant 0 : i32
    %17 = arith.cmpi eq, %arg1, %c0_i32_14 : i32
    %18 = arith.extui %17 : i1 to i32
    %c0_i32_15 = arith.constant 0 : i32
    %19 = arith.cmpi ne, %18, %c0_i32_15 : i32
    scf.if %19 {
      %c0_16 = arith.constant 0 : index
      %c0_17 = arith.constant 0 : index
      %20 = vector.load %arg9[%c0_16, %c0_17] : memref<64x256xf32, #tpu.memory_space<vmem>>, vector<64x256xf32>
      %c0_18 = arith.constant 0 : index
      %c0_19 = arith.constant 0 : index
      %21 = vector.load %arg6[%c0_18, %c0_19] : memref<1x256xf32, #tpu.memory_space<vmem>>, vector<1x256xf32>
      %22 = vector.broadcast %21 : vector<1x256xf32> to vector<64x256xf32>
      %23 = arith.addf %20, %22 : vector<64x256xf32>
      %c0_20 = arith.constant 0 : index
      %c0_21 = arith.constant 0 : index
      %24 = vector.load %arg7[%c0_20, %c0_21] : memref<64x256xf32, #tpu.memory_space<vmem>>, vector<64x256xf32>
      tpu.vector_store %arg7[%c0_20, %c0_21], %23 {strides = array<i32>} : memref<64x256xf32, #tpu.memory_space<vmem>>, vector<64x256xf32>,
    } else {
    }
    return
  }
  func.func @transform_0(%arg0: i32, %arg1: i32) -> (i32, i32) {
    %c0_i32 = arith.constant 0 : i32
    %c0_i32_0 = arith.constant 0 : i32
    return %arg0, %c0_i32 : i32, i32
  }
  func.func @transform_1(%arg0: i32, %arg1: i32) -> (i32, i32) {
    %c0_i32 = arith.constant 0 : i32
    %c0_i32_0 = arith.constant 0 : i32
    return %c0_i32, %arg1 : i32, i32
  }
  func.func @transform_2(%arg0: i32, %arg1: i32) -> (i32, i32) {
    %c0_i32 = arith.constant 0 : i32
    %c0_i32_0 = arith.constant 0 : i32
    return %c0_i32, %arg1 : i32, i32
  }
  func.func @transform_3(%arg0: i32, %arg1: i32) -> (i32, i32) {
    %c0_i32 = arith.constant 0 : i32
    %c0_i32_0 = arith.constant 0 : i32
    return %arg1, %c0_i32 : i32, i32
  }
  func.func @transform_4(%arg0: i32, %arg1: i32) -> (i32, i32) {
    %c0_i32 = arith.constant 0 : i32
    %c0_i32_0 = arith.constant 0 : i32
    %c0_i32_1 = arith.constant 0 : i32
    return %c0_i32, %c0_i32_0 : i32, i32
  }
  func.func @transform_5(%arg0: i32, %arg1: i32) -> (i32, i32) {
    %c0_i32 = arith.constant 0 : i32
    %c0_i32_0 = arith.constant 0 : i32
    return %arg0, %c0_i32 : i32, i32
  }
}

</mosaic_0001>

<llo_original>
// kernel: _ffn_impl.1
$region0: #{_ffn_impl.1}
  #allocation0 [shape = 'u32[]', space=smem, size = 0x4, offset = 0x4, fixed_abs, tag = 'smem constant byte address 0x4 - core index']
  #allocation1 [shape = 'u32[144,128]{1,0:T(1,128)}', space=vmem, size = 0x12000, scoped, tag = 'internal scratch']
  #allocation2 [shape = 'bf16[64,256]{1,0:T(16,128)(2,1)}', space=vmem, size = 0x8000, scoped, tag = 'scratch operand']
  #allocation3 [shape = 'f32[64,256]{1,0:T(8,128)}', space=vmem, size = 0x10000, scoped, tag = 'scratch operand']
  %s0 = inlined_call_operand.vmem [shape: f32[128,256], index: 0, kind: input, shape index: {}]
  %s1 = inlined_call_operand.vmem [shape: bf16[256,256], index: 1, kind: input, shape index: {}]
  %s2 = inlined_call_operand.vmem [shape: f32[1,256], index: 2, kind: input, shape index: {}]
  %s3 = inlined_call_operand.vmem [shape: bf16[256,256], index: 3, kind: input, shape index: {}]
  %s4 = inlined_call_operand.vmem [shape: f32[1,256], index: 4, kind: input, shape index: {}]
  %s5 = inlined_call_operand.vmem [shape: f32[128,256], index: 5, kind: output, shape index: {}]
  %s6 = sld [smem:[#allocation0]]
  $region61: #{_ffn_impl.1} parent=0
    _
  %s8 = ssub.s32 1, %s6
  %s9 = scalar_select 0, %s8, %s6
  loop: start=0, step=1, limit=4
  $region2: #{_ffn_impl.1} parent=0 // loop_pre_header
    _
  $region3: #{_ffn_impl.1} parent=0 // loop_header
    %s11 = sphi 0, %s15
    %p12 = scmp.ge.s32.totalorder %s11, 4
    %s18 = sphi 0, %s30
    %s19 = sphi 0, %s26
    %s20 = sphi 0, %s18
    %s21 = sphi 0, %s19
    %s22 = sphi 0, %s20
    %s23 = sphi 0, %s21
    %s33 = sphi 0, %s35
    %s36 = sphi 0, %s33
    %s37 = sphi 0, %s36
    %s53 = sphi 0, %s37
    %s59 = sphi 0, %s61
    %s62 = sphi 0, %s59
    %s63 = sphi 0, %s62
    %s79 = sphi 0, %s63
    %s85 = sphi 0, %s87
    %s88 = sphi 0, %s85
    %s89 = sphi 0, %s88
    %s105 = sphi 0, %s89
    %s111 = sphi 0, %s113
    %s114 = sphi 0, %s111
    %s115 = sphi 0, %s114
    %s131 = sphi 0, %s115
    %s135 = sphi 0, %s135
    %s137 = sphi 0, %s135
    %s138 = sphi 0, %s137
    %s152 = sphi 0, %s138
    %s158 = sphi 0, %s160
    %s161 = sphi 0, %s158
    %s162 = sphi 0, %s161
    %s178 = sphi 0, %s162
  $region4: #{_ffn_impl.1} parent=0 // loop_header_branch
    %14 = sbr.rel (%p12) target = $region8
  $region5: #{_ffn_impl.1} parent=0 // loop_body
    %s16 = ssub.s32 %s11, 1
    %s17 = ssub.s32 %s11, 2
    %s24 = sadd.s32 1, %s19
    %p25 = scmp.ge.s32.totalorder %s24, 1
    %s26 = scalar_select %p25, 0, %s24
    %s27 = sadd.s32 1, %s18
    %s28 = scalar_select %p25, %s27, %s18
    %p29 = scmp.ge.s32.totalorder %s28, 2
    %s30 = scalar_select %p29, 0, %s28
    %s31 = ssub.s32 %s18, %s30
    %p32 = scmp.eq.s32.totalorder %s31, 0
    %s34 = sadd.s32 %s33, 1
    %s35 = scalar_select %p32, %s33, %s34
    %p38 = pneg %p32
    %p39 = scmp.eq.s32.totalorder %s11, 1
    %p40 = por %p38, %p39
    %p41 = scmp.ne.s32.totalorder %s33, %s36
    %p42 = scmp.eq.s32.totalorder %s11, 0
    %p43 = por %p41, %p42
    %p44 = scmp.ne.s32.totalorder %s33, %s36
    %p45 = scmp.eq.s32.totalorder %s16, 1
    %p46 = por %p44, %p45
    %p47 = scmp.ne.s32.totalorder %s36, %s37
    %p48 = scmp.eq.s32.totalorder %s16, 0
    %p49 = por %p47, %p48
    %p50 = scmp.ne.s32.totalorder %s36, %s37
    %p51 = scmp.eq.s32.totalorder %s17, 1
    %p52 = por %p50, %p51
    %p54 = scmp.ne.s32.totalorder %s37, %s53
    %p55 = scmp.eq.s32.totalorder %s17, 0
    %p56 = por %p54, %p55
    %s57 = ssub.s32 %s19, %s26
    %p58 = scmp.eq.s32.totalorder %s57, 0
    %s60 = sadd.s32 %s59, 1
    %s61 = scalar_select %p58, %s59, %s60
    %p64 = pneg %p58
    %p65 = scmp.eq.s32.totalorder %s11, 1
    %p66 = por %p64, %p65
    %p67 = scmp.ne.s32.totalorder %s59, %s62
    %p68 = scmp.eq.s32.totalorder %s11, 0
    %p69 = por %p67, %p68
    %p70 = scmp.ne.s32.totalorder %s59, %s62
    %p71 = scmp.eq.s32.totalorder %s16, 1
    %p72 = por %p70, %p71
    %p73 = scmp.ne.s32.totalorder %s62, %s63
    %p74 = scmp.eq.s32.totalorder %s16, 0
    %p75 = por %p73, %p74
    %p76 = scmp.ne.s32.totalorder %s62, %s63
    %p77 = scmp.eq.s32.totalorder %s17, 1
    %p78 = por %p76, %p77
    %p80 = scmp.ne.s32.totalorder %s63, %s79
    %p81 = scmp.eq.s32.totalorder %s17, 0
    %p82 = por %p80, %p81
    %s83 = ssub.s32 %s19, %s26
    %p84 = scmp.eq.s32.totalorder %s83, 0
    %s86 = sadd.s32 %s85, 1
    %s87 = scalar_select %p84, %s85, %s86
    %p90 = pneg %p84
    %p91 = scmp.eq.s32.totalorder %s11, 1
    %p92 = por %p90, %p91
    %p93 = scmp.ne.s32.totalorder %s85, %s88
    %p94 = scmp.eq.s32.totalorder %s11, 0
    %p95 = por %p93, %p94
    %p96 = scmp.ne.s32.totalorder %s85, %s88
    %p97 = scmp.eq.s32.totalorder %s16, 1
    %p98 = por %p96, %p97
    %p99 = scmp.ne.s32.totalorder %s88, %s89
    %p100 = scmp.eq.s32.totalorder %s16, 0
    %p101 = por %p99, %p100
    %p102 = scmp.ne.s32.totalorder %s88, %s89
    %p103 = scmp.eq.s32.totalorder %s17, 1
    %p104 = por %p102, %p103
    %p106 = scmp.ne.s32.totalorder %s89, %s105
    %p107 = scmp.eq.s32.totalorder %s17, 0
    %p108 = por %p106, %p107
    %s109 = ssub.s32 %s19, %s26
    %p110 = scmp.eq.s32.totalorder %s109, 0
    %s112 = sadd.s32 %s111, 1
    %s113 = scalar_select %p110, %s111, %s112
    %p116 = pneg %p110
    %p117 = scmp.eq.s32.totalorder %s11, 1
    %p118 = por %p116, %p117
    %p119 = scmp.ne.s32.totalorder %s111, %s114
    %p120 = scmp.eq.s32.totalorder %s11, 0
    %p121 = por %p119, %p120
    %p122 = scmp.ne.s32.totalorder %s111, %s114
    %p123 = scmp.eq.s32.totalorder %s16, 1
    %p124 = por %p122, %p123
    %p125 = scmp.ne.s32.totalorder %s114, %s115
    %p126 = scmp.eq.s32.totalorder %s16, 0
    %p127 = por %p125, %p126
    %p128 = scmp.ne.s32.totalorder %s114, %s115
    %p129 = scmp.eq.s32.totalorder %s17, 1
    %p130 = por %p128, %p129
    %p132 = scmp.ne.s32.totalorder %s115, %s131
    %p133 = scmp.eq.s32.totalorder %s17, 0
    %p134 = por %p132, %p133
    %s136 = sadd.s32 %s135, 1
    %p139 = scmp.eq.s32.totalorder %s11, 1
    %p140 = scmp.ne.s32.totalorder %s135, %s137
    %p141 = scmp.eq.s32.totalorder %s11, 0
    %p142 = por %p140, %p141
    %p143 = scmp.ne.s32.totalorder %s135, %s137
    %p144 = scmp.eq.s32.totalorder %s16, 1
    %p145 = por %p143, %p144
    %p146 = scmp.ne.s32.totalorder %s137, %s138
    %p147 = scmp.eq.s32.totalorder %s16, 0
    %p148 = por %p146, %p147
    %p149 = scmp.ne.s32.totalorder %s137, %s138
    %p150 = scmp.eq.s32.totalorder %s17, 1
    %p151 = por %p149, %p150
    %p153 = scmp.ne.s32.totalorder %s138, %s152
    %p154 = scmp.eq.s32.totalorder %s17, 0
    %p155 = por %p153, %p154
    %s156 = ssub.s32 %s18, %s30
    %p157 = scmp.eq.s32.totalorder %s156, 0
    %s159 = sadd.s32 %s158, 1
    %s160 = scalar_select %p157, %s158, %s159
    %p163 = pneg %p157
    %p164 = scmp.eq.s32.totalorder %s11, 1
    %p165 = por %p163, %p164
    %p166 = scmp.ne.s32.totalorder %s158, %s161
    %p167 = scmp.eq.s32.totalorder %s11, 0
    %p168 = por %p166, %p167
    %p169 = scmp.ne.s32.totalorder %s158, %s161
    %p170 = scmp.eq.s32.totalorder %s16, 1
    %p171 = por %p169, %p170
    %p172 = scmp.ne.s32.totalorder %s161, %s162
    %p173 = scmp.eq.s32.totalorder %s16, 0
    %p174 = por %p172, %p173
    %p175 = scmp.ne.s32.totalorder %s161, %s162
    %p176 = scmp.eq.s32.totalorder %s17, 1
    %p177 = por %p175, %p176
    %p179 = scmp.ne.s32.totalorder %s162, %s178
    %p180 = scmp.eq.s32.totalorder %s17, 0
    %p181 = por %p179, %p180
    %p182 = scmp.le.s32.totalorder 1, %s11
    %p183 = scmp.lt.s32.totalorder %s11, 3
    %p184 = pnand %p182, %p183
    %p185 = pneg %p184
    // Predicated region
    $region9: #{_ffn_impl.1} parent=5 // pred_check
      _
    $region10: #{_ffn_impl.1} parent=5 // pred_check_branch
      %187 = sbr.rel (%p184) target = $region12
    $region11: #{_ffn_impl.1} parent=5 // pred_region
      %s188 = ssub.s32 %s11, 1
      // Predicated region
      $region13: #{_ffn_impl.1} parent=11 // pred_check
        %p189 = pneg %p75
      $region14: #{_ffn_impl.1} parent=11 // pred_check_branch
        %191 = sbr.rel (%p189) target = $region16
      $region15: #{_ffn_impl.1} parent=11 // pred_region
        %s192 = smul.u32 2, %s21
        %p193 = scmp.lt.s32.totalorder %s192, 1
        %s194 = scalar_select %p193, %s192, 1
        %s195 = smul.addr %s194, 4
        %s196 = scalar_lea.vmem %s1, %s195
        %s197 = smul.u32 2, %s21
      $region16: #{_ffn_impl.1} parent=11 // pred_fallthru
        _
      // Predicated region
      $region17: #{_ffn_impl.1} parent=11 // pred_check
        %p198 = pneg %p101
      $region18: #{_ffn_impl.1} parent=11 // pred_check_branch
        %200 = sbr.rel (%p198) target = $region20
      $region19: #{_ffn_impl.1} parent=11 // pred_region
        %s201 = smul.u32 2, %s21
        %p202 = scmp.lt.s32.totalorder %s201, 1
        %s203 = scalar_select %p202, %s201, 1
        %s204 = scalar_lea.vmem %s2, %s203
        %s205 = smul.u32 2, %s21
      $region20: #{_ffn_impl.1} parent=11 // pred_fallthru
        _
      // Predicated region
      $region21: #{_ffn_impl.1} parent=11 // pred_check
        %p206 = pneg %p127
      $region22: #{_ffn_impl.1} parent=11 // pred_check_branch
        %208 = sbr.rel (%p206) target = $region24
      $region23: #{_ffn_impl.1} parent=11 // pred_region
        %s209 = smul.u32 32, %s21
        %p210 = scmp.lt.s32.totalorder %s209, 31
        %s211 = scalar_select %p210, %s209, 31
        %s212 = smul.addr %s211, 2
        %s213 = smul.addr %s212, 4
        %s214 = scalar_lea.vmem %s3, %s213
        %s215 = smul.u32 32, %s21
      $region24: #{_ffn_impl.1} parent=11 // pred_fallthru
        _
      // Predicated region
      $region25: #{_ffn_impl.1} parent=11 // pred_check
        %p216 = pneg %p148
      $region26: #{_ffn_impl.1} parent=11 // pred_check_branch
        %218 = sbr.rel (%p216) target = $region28
      $region27: #{_ffn_impl.1} parent=11 // pred_region
        _
      $region28: #{_ffn_impl.1} parent=11 // pred_fallthru
        _
    $region12: #{_ffn_impl.1} parent=5 // pred_fallthru
      _
    %p219 = scmp.lt.s32.totalorder %s11, 2
    // Predicated region
    $region29: #{_ffn_impl.1} parent=5 // pred_check
      %p220 = pneg %p219
    $region30: #{_ffn_impl.1} parent=5 // pred_check_branch
      %222 = sbr.rel (%p220) target = $region32
    $region31: #{_ffn_impl.1} parent=5 // pred_region
      // Predicated region
      $region33: #{_ffn_impl.1} parent=31 // pred_check
        %p223 = pneg %p43
      $region34: #{_ffn_impl.1} parent=31 // pred_check_branch
        %225 = sbr.rel (%p223) target = $region36
      $region35: #{_ffn_impl.1} parent=31 // pred_region
        %s226 = smul.u32 8, %s18
        %p227 = scmp.lt.s32.totalorder %s226, 15
        %s228 = scalar_select %p227, %s226, 15
        %s229 = smul.addr %s228, 2
        %s230 = smul.addr %s229, 8
        %s231 = scalar_lea.vmem %s0, %s230
        %s232 = smul.u32 8, %s18
      $region36: #{_ffn_impl.1} parent=31 // pred_fallthru
        _
    $region32: #{_ffn_impl.1} parent=5 // pred_fallthru
      _
    %p233 = scmp.le.s32.totalorder 1, %s11
    %p234 = scmp.lt.s32.totalorder %s11, 3
    %p235 = pnand %p233, %p234
    %p236 = pneg %p235
    // Predicated region
    $region37: #{_ffn_impl.1} parent=5 // pred_check
      _
    $region38: #{_ffn_impl.1} parent=5 // pred_check_branch
      %238 = sbr.rel (%p235) target = $region40
    $region39: #{_ffn_impl.1} parent=5 // pred_region
      %s239 = ssub.s32 %s11, 1
      %s240 = smul.u32 8, %s20
      %p241 = scmp.lt.s32.totalorder %s240, 15
      %s242 = scalar_select %p241, %s240, 15
      %s243 = smul.addr %s242, 2
      %s244 = smul.addr %s243, 8
      %s245 = scalar_lea.vmem %s0, %s244
      %p246 = pneg %p49
      %p247 = pneg %p46
      %s248 = smul.u32 2, %s21
      %p249 = scmp.lt.s32.totalorder %s248, 1
      %s250 = scalar_select %p249, %s248, 1
      %s251 = smul.addr %s250, 4
      %s252 = scalar_lea.vmem %s1, %s251
      %p253 = pneg %p75
      %p254 = pneg %p72
      %s255 = smul.u32 2, %s21
      %p256 = scmp.lt.s32.totalorder %s255, 1
      %s257 = scalar_select %p256, %s255, 1
      %s258 = scalar_lea.vmem %s2, %s257
      %p259 = pneg %p101
      %p260 = pneg %p98
      %s261 = smul.u32 32, %s21
      %p262 = scmp.lt.s32.totalorder %s261, 31
      %s263 = scalar_select %p262, %s261, 31
      %s264 = smul.addr %s263, 2
      %s265 = smul.addr %s264, 4
      %s266 = scalar_lea.vmem %s3, %s265
      %p267 = pneg %p127
      %p268 = pneg %p124
      %p269 = pneg %p148
      %p270 = pneg %p145
      %p271 = pneg %p174
      %p272 = pneg %p171
      %s273 = smul.u32 8, %s20
      %p274 = scmp.lt.s32.totalorder %s273, 15
      %s275 = scalar_select %p274, %s273, 15
      %s276 = smul.addr %s275, 2
      %s277 = smul.addr %s276, 8
      %s278 = scalar_lea.vmem %s5, %s277
      %s279 = smul.u32 8, %s20
      %p280 = scmp.lt.s32.totalorder %s279, 15
      %s281 = scalar_select %p280, %s279, 15
      %s282 = smul.addr %s281, 2
      %s283 = smul.addr %s282, 8
      %s284 = scalar_lea.vmem %s0, %s283
      %s285 = smul.u32 8, %s20
      %s286 = smul.u32 2, %s21
      %p287 = scmp.lt.s32.totalorder %s286, 1
      %s288 = scalar_select %p287, %s286, 1
      %s289 = smul.addr %s288, 4
      %s290 = scalar_lea.vmem %s1, %s289
      %s291 = smul.u32 2, %s21
      %s292 = smul.u32 2, %s21
      %p293 = scmp.lt.s32.totalorder %s292, 1
      %s294 = scalar_select %p293, %s292, 1
      %s295 = scalar_lea.vmem %s2, %s294
      %s296 = smul.u32 2, %s21
      %s297 = smul.u32 32, %s21
      %p298 = scmp.lt.s32.totalorder %s297, 31
      %s299 = scalar_select %p298, %s297, 31
      %s300 = smul.addr %s299, 2
      %s301 = smul.addr %s300, 4
      %s302 = scalar_lea.vmem %s3, %s301
      %s303 = smul.u32 32, %s21
      %s304 = smul.u32 8, %s20
      %p305 = scmp.lt.s32.totalorder %s304, 15
      %s306 = scalar_select %p305, %s304, 15
      %s307 = smul.addr %s306, 2
      %s308 = smul.addr %s307, 8
      %s309 = scalar_lea.vmem %s5, %s308
      %s310 = smul.u32 8, %s20
      %p311 = scmp.eq.s32.totalorder %s21, 0
      // Predicated region
      $region41: #{_ffn_impl.1} parent=39 // pred_check
        %p312 = pneg %p311
      $region42: #{_ffn_impl.1} parent=39 // pred_check_branch
        %314 = sbr.rel (%p312) target = $region44
      $region43: #{_ffn_impl.1} parent=39 // pred_region
        %v315 = vld [vmem:[%s284] sm:$0xff]
        %v316 = vld [vmem:[%s284 + $0x8] sm:$0xff]
        %v317 = vld [vmem:[%s284 + $0x10] sm:$0xff]
        %v318 = vld [vmem:[%s284 + $0x18] sm:$0xff]
        %v319 = vld [vmem:[%s284 + $0x20] sm:$0xff]
        %v320 = vld [vmem:[%s284 + $0x28] sm:$0xff]
        %v321 = vld [vmem:[%s284 + $0x30] sm:$0xff]
        %v322 = vld [vmem:[%s284 + $0x38] sm:$0xff]
        %v323 = vld [vmem:[%s284 + $0x40] sm:$0xff]
        %v324 = vld [vmem:[%s284 + $0x48] sm:$0xff]
        %v325 = vld [vmem:[%s284 + $0x50] sm:$0xff]
        %v326 = vld [vmem:[%s284 + $0x58] sm:$0xff]
        %v327 = vld [vmem:[%s284 + $0x60] sm:$0xff]
        %v328 = vld [vmem:[%s284 + $0x68] sm:$0xff]
        %v329 = vld [vmem:[%s284 + $0x70] sm:$0xff]
        %v330 = vld [vmem:[%s284 + $0x78] sm:$0xff]
        %v331 = vpack.c.bf16 %v317, %v315
        %v332 = vpack.c.bf16 %v318, %v316
        %v333 = vpack.c.bf16 %v321, %v319
        %v334 = vpack.c.bf16 %v322, %v320
        %v335 = vpack.c.bf16 %v325, %v323
        %v336 = vpack.c.bf16 %v326, %v324
        %v337 = vpack.c.bf16 %v329, %v327
        %v338 = vpack.c.bf16 %v330, %v328
        %339 = vst [vmem:[#allocation2] sm:$0xff] %v331
        %340 = vst [vmem:[#allocation2 + $0x8] sm:$0xff] %v332
        %341 = vst [vmem:[#allocation2 + $0x10] sm:$0xff] %v333
        %342 = vst [vmem:[#allocation2 + $0x18] sm:$0xff] %v334
        %343 = vst [vmem:[#allocation2 + $0x20] sm:$0xff] %v335
        %344 = vst [vmem:[#allocation2 + $0x28] sm:$0xff] %v336
        %345 = vst [vmem:[#allocation2 + $0x30] sm:$0xff] %v337
        %346 = vst [vmem:[#allocation2 + $0x38] sm:$0xff] %v338
        %347 = vst [vmem:[#allocation3] sm:$0xff] 0.0
        %348 = vst [vmem:[#allocation3 + $0x8] sm:$0xff] 0.0
        %349 = vst [vmem:[#allocation3 + $0x10] sm:$0xff] 0.0
        %350 = vst [vmem:[#allocation3 + $0x18] sm:$0xff] 0.0
        %351 = vst [vmem:[#allocation3 + $0x20] sm:$0xff] 0.0
        %352 = vst [vmem:[#allocation3 + $0x28] sm:$0xff] 0.0
        %353 = vst [vmem:[#allocation3 + $0x30] sm:$0xff] 0.0
        %354 = vst [vmem:[#allocation3 + $0x38] sm:$0xff] 0.0
        %355 = vst [vmem:[#allocation3 + $0x40] sm:$0xff] 0.0
        %356 = vst [vmem:[#allocation3 + $0x48] sm:$0xff] 0.0
        %357 = vst [vmem:[#allocation3 + $0x50] sm:$0xff] 0.0
        %358 = vst [vmem:[#allocation3 + $0x58] sm:$0xff] 0.0
        %359 = vst [vmem:[#allocation3 + $0x60] sm:$0xff] 0.0
        %360 = vst [vmem:[#allocation3 + $0x68] sm:$0xff] 0.0
        %361 = vst [vmem:[#allocation3 + $0x70] sm:$0xff] 0.0
        %362 = vst [vmem:[#allocation3 + $0x78] sm:$0xff] 0.0
      $region44: #{_ffn_impl.1} parent=39 // pred_fallthru
        _
      %v363 = vld [vmem:[#allocation2] sm:$0xff]
      %v364 = vld [vmem:[#allocation2 + $0x8] sm:$0xff]
      %v365 = vld [vmem:[#allocation2 + $0x10] sm:$0xff]
      %v366 = vld [vmem:[#allocation2 + $0x18] sm:$0xff]
      %v367 = vld [vmem:[#allocation2 + $0x20] sm:$0xff]
      %v368 = vld [vmem:[#allocation2 + $0x28] sm:$0xff]
      %v369 = vld [vmem:[#allocation2 + $0x30] sm:$0xff]
      %v370 = vld [vmem:[#allocation2 + $0x38] sm:$0xff]
      %v371 = vld [vmem:[%s290] sm:$0xff]
      %v372 = vld [vmem:[%s290 + $0x8] sm:$0xff]
      %v373 = vld [vmem:[%s290 + $0x10] sm:$0xff]
      %v374 = vld [vmem:[%s290 + $0x18] sm:$0xff]
      %v375 = vld [vmem:[%s290 + $0x20] sm:$0xff]
      %v376 = vld [vmem:[%s290 + $0x28] sm:$0xff]
      %v377 = vld [vmem:[%s290 + $0x30] sm:$0xff]
      %v378 = vld [vmem:[%s290 + $0x38] sm:$0xff]
      %v379 = vld [vmem:[%s290 + $0x40] sm:$0xff]
      %v380 = vld [vmem:[%s290 + $0x48] sm:$0xff]
      %v381 = vld [vmem:[%s290 + $0x50] sm:$0xff]
      %v382 = vld [vmem:[%s290 + $0x58] sm:$0xff]
      %v383 = vld [vmem:[%s290 + $0x60] sm:$0xff]
      %v384 = vld [vmem:[%s290 + $0x68] sm:$0xff]
      %v385 = vld [vmem:[%s290 + $0x70] sm:$0xff]
      %v386 = vld [vmem:[%s290 + $0x78] sm:$0xff]
      %v387 = vld [vmem:[%s290 + $0x80] sm:$0xff]
      %v388 = vld [vmem:[%s290 + $0x88] sm:$0xff]
      %v389 = vld [vmem:[%s290 + $0x90] sm:$0xff]
      %v390 = vld [vmem:[%s290 + $0x98] sm:$0xff]
      %v391 = vld [vmem:[%s290 + $0xa0] sm:$0xff]
      %v392 = vld [vmem:[%s290 + $0xa8] sm:$0xff]
      %v393 = vld [vmem:[%s290 + $0xb0] sm:$0xff]
      %v394 = vld [vmem:[%s290 + $0xb8] sm:$0xff]
      %v395 = vld [vmem:[%s290 + $0xc0] sm:$0xff]
      %v396 = vld [vmem:[%s290 + $0xc8] sm:$0xff]
      %v397 = vld [vmem:[%s290 + $0xd0] sm:$0xff]
      %v398 = vld [vmem:[%s290 + $0xd8] sm:$0xff]
      %v399 = vld [vmem:[%s290 + $0xe0] sm:$0xff]
      %v400 = vld [vmem:[%s290 + $0xe8] sm:$0xff]
      %v401 = vld [vmem:[%s290 + $0xf0] sm:$0xff]
      %v402 = vld [vmem:[%s290 + $0xf8] sm:$0xff]
      %v403 = vld [vmem:[%s295] sm:$0x3]
      %v405 = vlaneseq
      %v406 = vshrl.u32 %v405, 7
      %v407 = vsub.s32 0, %v406
      %v408 = vrot.slane %v403, %v407
      %v409 = vlaneseq
      %v410 = vshrl.u32 %v409, 7
      %v411 = vsub.s32 1, %v410
      %v412 = vrot.slane %v403, %v411
      %v447 = vunpack.c.l.b16 %v371
      %v448 = vunpack.c.h.b16 %v371
      %v449 = vunpack.c.l.b16 %v372
      %v450 = vunpack.c.h.b16 %v372
      %v451 = vunpack.c.l.b16 %v373
      %v452 = vunpack.c.h.b16 %v373
      %v453 = vunpack.c.l.b16 %v374
      %v454 = vunpack.c.h.b16 %v374
      %v455 = vunpack.c.l.b16 %v375
      %v456 = vunpack.c.h.b16 %v375
      %v457 = vunpack.c.l.b16 %v376
      %v458 = vunpack.c.h.b16 %v376
      %v459 = vunpack.c.l.b16 %v377
      %v460 = vunpack.c.h.b16 %v377
      %v461 = vunpack.c.l.b16 %v378
      %v462 = vunpack.c.h.b16 %v378
      %v463 = vunpack.c.l.b16 %v379
      %v464 = vunpack.c.h.b16 %v379
      %v465 = vunpack.c.l.b16 %v380
      %v466 = vunpack.c.h.b16 %v380
      %v467 = vunpack.c.l.b16 %v381
      %v468 = vunpack.c.h.b16 %v381
      %v469 = vunpack.c.l.b16 %v382
      %v470 = vunpack.c.h.b16 %v382
      %v471 = vunpack.c.l.b16 %v383
      %v472 = vunpack.c.h.b16 %v383
      %v473 = vunpack.c.l.b16 %v384
      %v474 = vunpack.c.h.b16 %v384
      %v475 = vunpack.c.l.b16 %v385
      %v476 = vunpack.c.h.b16 %v385
      %v477 = vunpack.c.l.b16 %v386
      %v478 = vunpack.c.h.b16 %v386
      %v479 = vunpack.c.l.b16 %v387
      %v480 = vunpack.c.h.b16 %v387
      %v481 = vunpack.c.l.b16 %v388
      %v482 = vunpack.c.h.b16 %v388
      %v483 = vunpack.c.l.b16 %v389
      %v484 = vunpack.c.h.b16 %v389
      %v485 = vunpack.c.l.b16 %v390
      %v486 = vunpack.c.h.b16 %v390
      %v487 = vunpack.c.l.b16 %v391
      %v488 = vunpack.c.h.b16 %v391
      %v489 = vunpack.c.l.b16 %v392
      %v490 = vunpack.c.h.b16 %v392
      %v491 = vunpack.c.l.b16 %v393
      %v492 = vunpack.c.h.b16 %v393
      %v493 = vunpack.c.l.b16 %v394
      %v494 = vunpack.c.h.b16 %v394
      %v495 = vunpack.c.l.b16 %v395
      %v496 = vunpack.c.h.b16 %v395
      %v497 = vunpack.c.l.b16 %v396
      %v498 = vunpack.c.h.b16 %v396
      %v499 = vunpack.c.l.b16 %v397
      %v500 = vunpack.c.h.b16 %v397
      %v501 = vunpack.c.l.b16 %v398
      %v502 = vunpack.c.h.b16 %v398
      %v503 = vunpack.c.l.b16 %v399
      %v504 = vunpack.c.h.b16 %v399
      %v505 = vunpack.c.l.b16 %v400
      %v506 = vunpack.c.h.b16 %v400
      %v507 = vunpack.c.l.b16 %v401
      %v508 = vunpack.c.h.b16 %v401
      %v509 = vunpack.c.l.b16 %v402
      %v510 = vunpack.c.h.b16 %v402
      %v511 = vpack.c.b16 %v449, %v447
      %v512 = vpack.c.b16 %v450, %v448
      %v513 = vpack.c.b16 %v453, %v451
      %v514 = vpack.c.b16 %v454, %v452
      %v515 = vpack.c.b16 %v457, %v455
      %v516 = vpack.c.b16 %v458, %v456
      %v517 = vpack.c.b16 %v461, %v459
      %v518 = vpack.c.b16 %v462, %v460
      %v519 = vpack.c.b16 %v465, %v463
      %v520 = vpack.c.b16 %v466, %v464
      %v521 = vpack.c.b16 %v469, %v467
      %v522 = vpack.c.b16 %v470, %v468
      %v523 = vpack.c.b16 %v473, %v471
      %v524 = vpack.c.b16 %v474, %v472
      %v525 = vpack.c.b16 %v477, %v475
      %v526 = vpack.c.b16 %v478, %v476
      %v527 = vpack.c.b16 %v481, %v479
      %v528 = vpack.c.b16 %v482, %v480
      %v529 = vpack.c.b16 %v485, %v483
      %v530 = vpack.c.b16 %v486, %v484
      %v531 = vpack.c.b16 %v489, %v487
      %v532 = vpack.c.b16 %v490, %v488
      %v533 = vpack.c.b16 %v493, %v491
      %v534 = vpack.c.b16 %v494, %v492
      %v535 = vpack.c.b16 %v497, %v495
      %v536 = vpack.c.b16 %v498, %v496
      %v537 = vpack.c.b16 %v501, %v499
      %v538 = vpack.c.b16 %v502, %v500
      %v539 = vpack.c.b16 %v505, %v503
      %v540 = vpack.c.b16 %v506, %v504
      %v541 = vpack.c.b16 %v509, %v507
      %v542 = vpack.c.b16 %v510, %v508
      %575 = vmatprep.subr.bf16.mxu0 %v512
      %576 = vmatpush1.bf16.msra.mxu0 %v511
      %577 = vmatprep.subr.bf16.mxu0 %v514
      %578 = vmatpush1.bf16.msra.mxu0 %v513
      %579 = vmatprep.subr.bf16.mxu0 %v516
      %580 = vmatpush1.bf16.msra.mxu0 %v515
      %581 = vmatprep.subr.bf16.mxu0 %v518
      %582 = vmatpush1.bf16.msra.mxu0 %v517
      %583 = vmatprep.subr.bf16.mxu0 %v520
      %584 = vmatpush1.bf16.msra.mxu0 %v519
      %585 = vmatprep.subr.bf16.mxu0 %v522
      %586 = vmatpush1.bf16.msra.mxu0 %v521
      %587 = vmatprep.subr.bf16.mxu0 %v524
      %588 = vmatpush1.bf16.msra.mxu0 %v523
      %589 = vmatprep.subr.bf16.mxu0 %v526
      %590 = vmatpush1.bf16.msra.mxu0 %v525
      %591 = vmatprep.subr.bf16.mxu0 %v528
      %592 = vmatpush1.bf16.msra.mxu0 %v527
      %593 = vmatprep.subr.bf16.mxu0 %v530
      %594 = vmatpush1.bf16.msra.mxu0 %v529
      %595 = vmatprep.subr.bf16.mxu0 %v532
      %596 = vmatpush1.bf16.msra.mxu0 %v531
      %597 = vmatprep.subr.bf16.mxu0 %v534
      %598 = vmatpush1.bf16.msra.mxu0 %v533
      %599 = vmatprep.subr.bf16.mxu0 %v536
      %600 = vmatpush1.bf16.msra.mxu0 %v535
      %601 = vmatprep.subr.bf16.mxu0 %v538
      %602 = vmatpush1.bf16.msra.mxu0 %v537
      %603 = vmatprep.subr.bf16.mxu0 %v540
      %604 = vmatpush1.bf16.msra.mxu0 %v539
      %605 = vmatprep.subr.bf16.mxu0 %v542
      %606 = vmatpush1.bf16.msra.mxu0 %v541
      %607 = vmatprep.mubr.bf16.mxu0 %v364
      %608 = vmatmul.mubr.bf16.gmra.mrb[0].mxu0 %v363
      %v609 = vpop.f32.mrb[0].mxu0
      %v610 = vadd.f32 %v408, %v609
      %v611 = vpop.f32.mrb[0].mxu0
      %v612 = vadd.f32 %v412, %v611
      %v613 = vpop.f32.mrb[0].mxu0
      %v614 = vadd.f32 %v408, %v613
      %v615 = vpop.f32.mrb[0].mxu0
      %v616 = vadd.f32 %v412, %v615
      %617 = vmatprep.mubr.bf16.mxu0 %v366
      %618 = vmatmul.mubr.bf16.gmra.mrb[0].mxu0 %v365
      %v619 = vpop.f32.mrb[0].mxu0
      %v620 = vadd.f32 %v408, %v619
      %v621 = vpop.f32.mrb[0].mxu0
      %v622 = vadd.f32 %v412, %v621
      %v623 = vpop.f32.mrb[0].mxu0
      %v624 = vadd.f32 %v408, %v623
      %v625 = vpop.f32.mrb[0].mxu0
      %v626 = vadd.f32 %v412, %v625
      %627 = vmatprep.mubr.bf16.mxu0 %v368
      %628 = vmatmul.mubr.bf16.gmra.mrb[0].mxu0 %v367
      %v629 = vpop.f32.mrb[0].mxu0
      %v630 = vadd.f32 %v408, %v629
      %v631 = vpop.f32.mrb[0].mxu0
      %v632 = vadd.f32 %v412, %v631
      %v633 = vpop.f32.mrb[0].mxu0
      %v634 = vadd.f32 %v408, %v633
      %v635 = vpop.f32.mrb[0].mxu0
      %v636 = vadd.f32 %v412, %v635
      %637 = vmatprep.mubr.bf16.mxu0 %v370
      %638 = vmatmul.mubr.bf16.gmra.mrb[0].mxu0 %v369
      %v639 = vpop.f32.mrb[0].mxu0
      %v640 = vadd.f32 %v408, %v639
      %v641 = vpop.f32.mrb[0].mxu0
      %v642 = vadd.f32 %v412, %v641
      %v643 = vpop.f32.mrb[0].mxu0
      %v644 = vadd.f32 %v408, %v643
      %v645 = vpop.f32.mrb[0].mxu0
      %v646 = vadd.f32 %v412, %v645
      %647 = vdwg.mxu0
      %v648 = vmax.f32 %v610, 0.0
      %v649 = vmax.f32 %v612, 0.0
      %v650 = vmax.f32 %v614, 0.0
      %v651 = vmax.f32 %v616, 0.0
      %v652 = vmax.f32 %v620, 0.0
      %v653 = vmax.f32 %v622, 0.0
      %v654 = vmax.f32 %v624, 0.0
      %v655 = vmax.f32 %v626, 0.0
      %v656 = vmax.f32 %v630, 0.0
      %v657 = vmax.f32 %v632, 0.0
      %v658 = vmax.f32 %v634, 0.0
      %v659 = vmax.f32 %v636, 0.0
      %v660 = vmax.f32 %v640, 0.0
      %v661 = vmax.f32 %v642, 0.0
      %v662 = vmax.f32 %v644, 0.0
      %v663 = vmax.f32 %v646, 0.0
      %v664 = vld [vmem:[#allocation3] sm:$0xff]
      %v665 = vld [vmem:[#allocation3 + $0x8] sm:$0xff]
      %v666 = vld [vmem:[#allocation3 + $0x10] sm:$0xff]
      %v667 = vld [vmem:[#allocation3 + $0x18] sm:$0xff]
      %v668 = vld [vmem:[#allocation3 + $0x20] sm:$0xff]
      %v669 = vld [vmem:[#allocation3 + $0x28] sm:$0xff]
      %v670 = vld [vmem:[#allocation3 + $0x30] sm:$0xff]
      %v671 = vld [vmem:[#allocation3 + $0x38] sm:$0xff]
      %v672 = vld [vmem:[#allocation3 + $0x40] sm:$0xff]
      %v673 = vld [vmem:[#allocation3 + $0x48] sm:$0xff]
      %v674 = vld [vmem:[#allocation3 + $0x50] sm:$0xff]
      %v675 = vld [vmem:[#allocation3 + $0x58] sm:$0xff]
      %v676 = vld [vmem:[#allocation3 + $0x60] sm:$0xff]
      %v677 = vld [vmem:[#allocation3 + $0x68] sm:$0xff]
      %v678 = vld [vmem:[#allocation3 + $0x70] sm:$0xff]
      %v679 = vld [vmem:[#allocation3 + $0x78] sm:$0xff]
      %v680 = vpack.c.bf16 %v650, %v648
      %v681 = vpack.c.bf16 %v651, %v649
      %v682 = vpack.c.bf16 %v654, %v652
      %v683 = vpack.c.bf16 %v655, %v653
      %v684 = vpack.c.bf16 %v658, %v656
      %v685 = vpack.c.bf16 %v659, %v657
      %v686 = vpack.c.bf16 %v662, %v660
      %v687 = vpack.c.bf16 %v663, %v661
      %v688 = vld [vmem:[%s302] sm:$0xff]
      %v689 = vld [vmem:[%s302 + $0x8] sm:$0xff]
      %v690 = vld [vmem:[%s302 + $0x10] sm:$0xff]
      %v691 = vld [vmem:[%s302 + $0x18] sm:$0xff]
      %v692 = vld [vmem:[%s302 + $0x20] sm:$0xff]
      %v693 = vld [vmem:[%s302 + $0x28] sm:$0xff]
      %v694 = vld [vmem:[%s302 + $0x30] sm:$0xff]
      %v695 = vld [vmem:[%s302 + $0x38] sm:$0xff]
      %v696 = vld [vmem:[%s302 + $0x40] sm:$0xff]
      %v697 = vld [vmem:[%s302 + $0x48] sm:$0xff]
      %v698 = vld [vmem:[%s302 + $0x50] sm:$0xff]
      %v699 = vld [vmem:[%s302 + $0x58] sm:$0xff]
      %v700 = vld [vmem:[%s302 + $0x60] sm:$0xff]
      %v701 = vld [vmem:[%s302 + $0x68] sm:$0xff]
      %v702 = vld [vmem:[%s302 + $0x70] sm:$0xff]
      %v703 = vld [vmem:[%s302 + $0x78] sm:$0xff]
      %v704 = vld [vmem:[%s302 + $0x80] sm:$0xff]
      %v705 = vld [vmem:[%s302 + $0x88] sm:$0xff]
      %v706 = vld [vmem:[%s302 + $0x90] sm:$0xff]
      %v707 = vld [vmem:[%s302 + $0x98] sm:$0xff]
      %v708 = vld [vmem:[%s302 + $0xa0] sm:$0xff]
      %v709 = vld [vmem:[%s302 + $0xa8] sm:$0xff]
      %v710 = vld [vmem:[%s302 + $0xb0] sm:$0xff]
      %v711 = vld [vmem:[%s302 + $0xb8] sm:$0xff]
      %v712 = vld [vmem:[%s302 + $0xc0] sm:$0xff]
      %v713 = vld [vmem:[%s302 + $0xc8] sm:$0xff]
      %v714 = vld [vmem:[%s302 + $0xd0] sm:$0xff]
      %v715 = vld [vmem:[%s302 + $0xd8] sm:$0xff]
      %v716 = vld [vmem:[%s302 + $0xe0] sm:$0xff]
      %v717 = vld [vmem:[%s302 + $0xe8] sm:$0xff]
      %v718 = vld [vmem:[%s302 + $0xf0] sm:$0xff]
      %v719 = vld [vmem:[%s302 + $0xf8] sm:$0xff]
      %v752 = vunpack.c.l.b16 %v688
      %v753 = vunpack.c.h.b16 %v688
      %v754 = vunpack.c.l.b16 %v689
      %v755 = vunpack.c.h.b16 %v689
      %v756 = vunpack.c.l.b16 %v690
      %v757 = vunpack.c.h.b16 %v690
      %v758 = vunpack.c.l.b16 %v691
      %v759 = vunpack.c.h.b16 %v691
      %v760 = vunpack.c.l.b16 %v692
      %v761 = vunpack.c.h.b16 %v692
      %v762 = vunpack.c.l.b16 %v693
      %v763 = vunpack.c.h.b16 %v693
      %v764 = vunpack.c.l.b16 %v694
      %v765 = vunpack.c.h.b16 %v694
      %v766 = vunpack.c.l.b16 %v695
      %v767 = vunpack.c.h.b16 %v695
      %v768 = vunpack.c.l.b16 %v696
      %v769 = vunpack.c.h.b16 %v696
      %v770 = vunpack.c.l.b16 %v697
      %v771 = vunpack.c.h.b16 %v697
      %v772 = vunpack.c.l.b16 %v698
      %v773 = vunpack.c.h.b16 %v698
      %v774 = vunpack.c.l.b16 %v699
      %v775 = vunpack.c.h.b16 %v699
      %v776 = vunpack.c.l.b16 %v700
      %v777 = vunpack.c.h.b16 %v700
      %v778 = vunpack.c.l.b16 %v701
      %v779 = vunpack.c.h.b16 %v701
      %v780 = vunpack.c.l.b16 %v702
      %v781 = vunpack.c.h.b16 %v702
      %v782 = vunpack.c.l.b16 %v703
      %v783 = vunpack.c.h.b16 %v703
      %v784 = vunpack.c.l.b16 %v704
      %v785 = vunpack.c.h.b16 %v704
      %v786 = vunpack.c.l.b16 %v705
      %v787 = vunpack.c.h.b16 %v705
      %v788 = vunpack.c.l.b16 %v706
      %v789 = vunpack.c.h.b16 %v706
      %v790 = vunpack.c.l.b16 %v707
      %v791 = vunpack.c.h.b16 %v707
      %v792 = vunpack.c.l.b16 %v708
      %v793 = vunpack.c.h.b16 %v708
      %v794 = vunpack.c.l.b16 %v709
      %v795 = vunpack.c.h.b16 %v709
      %v796 = vunpack.c.l.b16 %v710
      %v797 = vunpack.c.h.b16 %v710
      %v798 = vunpack.c.l.b16 %v711
      %v799 = vunpack.c.h.b16 %v711
      %v800 = vunpack.c.l.b16 %v712
      %v801 = vunpack.c.h.b16 %v712
      %v802 = vunpack.c.l.b16 %v713
      %v803 = vunpack.c.h.b16 %v713
      %v804 = vunpack.c.l.b16 %v714
      %v805 = vunpack.c.h.b16 %v714
      %v806 = vunpack.c.l.b16 %v715
      %v807 = vunpack.c.h.b16 %v715
      %v808 = vunpack.c.l.b16 %v716
      %v809 = vunpack.c.h.b16 %v716
      %v810 = vunpack.c.l.b16 %v717
      %v811 = vunpack.c.h.b16 %v717
      %v812 = vunpack.c.l.b16 %v718
      %v813 = vunpack.c.h.b16 %v718
      %v814 = vunpack.c.l.b16 %v719
      %v815 = vunpack.c.h.b16 %v719
      %v816 = vpack.c.b16 %v754, %v752
      %v817 = vpack.c.b16 %v755, %v753
      %v818 = vpack.c.b16 %v758, %v756
      %v819 = vpack.c.b16 %v759, %v757
      %v820 = vpack.c.b16 %v762, %v760
      %v821 = vpack.c.b16 %v763, %v761
      %v822 = vpack.c.b16 %v766, %v764
      %v823 = vpack.c.b16 %v767, %v765
      %v824 = vpack.c.b16 %v770, %v768
      %v825 = vpack.c.b16 %v771, %v769
      %v826 = vpack.c.b16 %v774, %v772
      %v827 = vpack.c.b16 %v775, %v773
      %v828 = vpack.c.b16 %v778, %v776
      %v829 = vpack.c.b16 %v779, %v777
      %v830 = vpack.c.b16 %v782, %v780
      %v831 = vpack.c.b16 %v783, %v781
      %v832 = vpack.c.b16 %v786, %v784
      %v833 = vpack.c.b16 %v787, %v785
      %v834 = vpack.c.b16 %v790, %v788
      %v835 = vpack.c.b16 %v791, %v789
      %v836 = vpack.c.b16 %v794, %v792
      %v837 = vpack.c.b16 %v795, %v793
      %v838 = vpack.c.b16 %v798, %v796
      %v839 = vpack.c.b16 %v799, %v797
      %v840 = vpack.c.b16 %v802, %v800
      %v841 = vpack.c.b16 %v803, %v801
      %v842 = vpack.c.b16 %v806, %v804
      %v843 = vpack.c.b16 %v807, %v805
      %v844 = vpack.c.b16 %v810, %v808
      %v845 = vpack.c.b16 %v811, %v809
      %v846 = vpack.c.b16 %v814, %v812
      %v847 = vpack.c.b16 %v815, %v813
      %880 = vmatprep.subr.bf16.mxu0 %v817
      %881 = vmatpush1.bf16.msra.mxu0 %v816
      %882 = vmatprep.subr.bf16.mxu0 %v819
      %883 = vmatpush1.bf16.msra.mxu0 %v818
      %884 = vmatprep.subr.bf16.mxu0 %v821
      %885 = vmatpush1.bf16.msra.mxu0 %v820
      %886 = vmatprep.subr.bf16.mxu0 %v823
      %887 = vmatpush1.bf16.msra.mxu0 %v822
      %888 = vmatprep.subr.bf16.mxu0 %v825
      %889 = vmatpush1.bf16.msra.mxu0 %v824
      %890 = vmatprep.subr.bf16.mxu0 %v827
      %891 = vmatpush1.bf16.msra.mxu0 %v826
      %892 = vmatprep.subr.bf16.mxu0 %v829
      %893 = vmatpush1.bf16.msra.mxu0 %v828
      %894 = vmatprep.subr.bf16.mxu0 %v831
      %895 = vmatpush1.bf16.msra.mxu0 %v830
      %896 = vmatprep.subr.bf16.mxu0 %v833
      %897 = vmatpush1.bf16.msra.mxu0 %v832
      %898 = vmatprep.subr.bf16.mxu0 %v835
      %899 = vmatpush1.bf16.msra.mxu0 %v834
      %900 = vmatprep.subr.bf16.mxu0 %v837
      %901 = vmatpush1.bf16.msra.mxu0 %v836
      %902 = vmatprep.subr.bf16.mxu0 %v839
      %903 = vmatpush1.bf16.msra.mxu0 %v838
      %904 = vmatprep.subr.bf16.mxu0 %v841
      %905 = vmatpush1.bf16.msra.mxu0 %v840
      %906 = vmatprep.subr.bf16.mxu0 %v843
      %907 = vmatpush1.bf16.msra.mxu0 %v842
      %908 = vmatprep.subr.bf16.mxu0 %v845
      %909 = vmatpush1.bf16.msra.mxu0 %v844
      %910 = vmatprep.subr.bf16.mxu0 %v847
      %911 = vmatpush1.bf16.msra.mxu0 %v846
      %912 = vmatprep.mubr.bf16.mxu0 %v681
      %913 = vmatmul.mubr.bf16.gmra.mrb[0].mxu0 %v680
      %v914 = vpop.f32.mrb[0].mxu0
      %v915 = vadd.f32 0.0, %v914
      %v916 = vpop.f32.mrb[0].mxu0
      %v917 = vadd.f32 0.0, %v916
      %v918 = vpop.f32.mrb[0].mxu0
      %v919 = vadd.f32 0.0, %v918
      %v920 = vpop.f32.mrb[0].mxu0
      %v921 = vadd.f32 0.0, %v920
      %922 = vmatprep.mubr.bf16.mxu0 %v683
      %923 = vmatmul.mubr.bf16.gmra.mrb[0].mxu0 %v682
      %v924 = vpop.f32.mrb[0].mxu0
      %v925 = vadd.f32 0.0, %v924
      %v926 = vpop.f32.mrb[0].mxu0
      %v927 = vadd.f32 0.0, %v926
      %v928 = vpop.f32.mrb[0].mxu0
      %v929 = vadd.f32 0.0, %v928
      %v930 = vpop.f32.mrb[0].mxu0
      %v931 = vadd.f32 0.0, %v930
      %932 = vmatprep.mubr.bf16.mxu0 %v685
      %933 = vmatmul.mubr.bf16.gmra.mrb[0].mxu0 %v684
      %v934 = vpop.f32.mrb[0].mxu0
      %v935 = vadd.f32 0.0, %v934
      %v936 = vpop.f32.mrb[0].mxu0
      %v937 = vadd.f32 0.0, %v936
      %v938 = vpop.f32.mrb[0].mxu0
      %v939 = vadd.f32 0.0, %v938
      %v940 = vpop.f32.mrb[0].mxu0
      %v941 = vadd.f32 0.0, %v940
      %942 = vmatprep.mubr.bf16.mxu0 %v687
      %943 = vmatmul.mubr.bf16.gmra.mrb[0].mxu0 %v686
      %v944 = vpop.f32.mrb[0].mxu0
      %v945 = vadd.f32 0.0, %v944
      %v946 = vpop.f32.mrb[0].mxu0
      %v947 = vadd.f32 0.0, %v946
      %v948 = vpop.f32.mrb[0].mxu0
      %v949 = vadd.f32 0.0, %v948
      %v950 = vpop.f32.mrb[0].mxu0
      %v951 = vadd.f32 0.0, %v950
      %952 = vdwg.mxu0
      %v953 = vadd.f32 %v664, %v915
      %v954 = vadd.f32 %v665, %v917
      %v955 = vadd.f32 %v666, %v919
      %v956 = vadd.f32 %v667, %v921
      %v957 = vadd.f32 %v668, %v925
      %v958 = vadd.f32 %v669, %v927
      %v959 = vadd.f32 %v670, %v929
      %v960 = vadd.f32 %v671, %v931
      %v961 = vadd.f32 %v672, %v935
      %v962 = vadd.f32 %v673, %v937
      %v963 = vadd.f32 %v674, %v939
      %v964 = vadd.f32 %v675, %v941
      %v965 = vadd.f32 %v676, %v945
      %v966 = vadd.f32 %v677, %v947
      %v967 = vadd.f32 %v678, %v949
      %v968 = vadd.f32 %v679, %v951
      %969 = vst [vmem:[#allocation3] sm:$0xff] %v953
      %970 = vst [vmem:[#allocation3 + $0x8] sm:$0xff] %v954
      %971 = vst [vmem:[#allocation3 + $0x10] sm:$0xff] %v955
      %972 = vst [vmem:[#allocation3 + $0x18] sm:$0xff] %v956
      %973 = vst [vmem:[#allocation3 + $0x20] sm:$0xff] %v957
      %974 = vst [vmem:[#allocation3 + $0x28] sm:$0xff] %v958
      %975 = vst [vmem:[#allocation3 + $0x30] sm:$0xff] %v959
      %976 = vst [vmem:[#allocation3 + $0x38] sm:$0xff] %v960
      %977 = vst [vmem:[#allocation3 + $0x40] sm:$0xff] %v961
      %978 = vst [vmem:[#allocation3 + $0x48] sm:$0xff] %v962
      %979 = vst [vmem:[#allocation3 + $0x50] sm:$0xff] %v963
      %980 = vst [vmem:[#allocation3 + $0x58] sm:$0xff] %v964
      %981 = vst [vmem:[#allocation3 + $0x60] sm:$0xff] %v965
      %982 = vst [vmem:[#allocation3 + $0x68] sm:$0xff] %v966
      %983 = vst [vmem:[#allocation3 + $0x70] sm:$0xff] %v967
      %984 = vst [vmem:[#allocation3 + $0x78] sm:$0xff] %v968
      // Predicated region
      $region45: #{_ffn_impl.1} parent=39 // pred_check
        %p985 = pneg %p311
      $region46: #{_ffn_impl.1} parent=39 // pred_check_branch
        %987 = sbr.rel (%p985) target = $region48
      $region47: #{_ffn_impl.1} parent=39 // pred_region
        %v988 = vld [vmem:[#allocation3] sm:$0xff]
        %v989 = vld [vmem:[#allocation3 + $0x8] sm:$0xff]
        %v990 = vld [vmem:[#allocation3 + $0x10] sm:$0xff]
        %v991 = vld [vmem:[#allocation3 + $0x18] sm:$0xff]
        %v992 = vld [vmem:[#allocation3 + $0x20] sm:$0xff]
        %v993 = vld [vmem:[#allocation3 + $0x28] sm:$0xff]
        %v994 = vld [vmem:[#allocation3 + $0x30] sm:$0xff]
        %v995 = vld [vmem:[#allocation3 + $0x38] sm:$0xff]
        %v996 = vld [vmem:[#allocation3 + $0x40] sm:$0xff]
        %v997 = vld [vmem:[#allocation3 + $0x48] sm:$0xff]
        %v998 = vld [vmem:[#allocation3 + $0x50] sm:$0xff]
        %v999 = vld [vmem:[#allocation3 + $0x58] sm:$0xff]
        %v1000 = vld [vmem:[#allocation3 + $0x60] sm:$0xff]
        %v1001 = vld [vmem:[#allocation3 + $0x68] sm:$0xff]
        %v1002 = vld [vmem:[#allocation3 + $0x70] sm:$0xff]
        %v1003 = vld [vmem:[#allocation3 + $0x78] sm:$0xff]
        %v1004 = vld [vmem:[%s4] sm:$0x3]
        %v1006 = vlaneseq
        %v1007 = vshrl.u32 %v1006, 7
        %v1008 = vsub.s32 0, %v1007
        %v1009 = vrot.slane %v1004, %v1008
        %v1010 = vlaneseq
        %v1011 = vshrl.u32 %v1010, 7
        %v1012 = vsub.s32 1, %v1011
        %v1013 = vrot.slane %v1004, %v1012
        %v1016 = vadd.f32 %v988, %v1009
        %v1017 = vadd.f32 %v989, %v1013
        %v1018 = vadd.f32 %v990, %v1009
        %v1019 = vadd.f32 %v991, %v1013
        %v1020 = vadd.f32 %v992, %v1009
        %v1021 = vadd.f32 %v993, %v1013
        %v1022 = vadd.f32 %v994, %v1009
        %v1023 = vadd.f32 %v995, %v1013
        %v1024 = vadd.f32 %v996, %v1009
        %v1025 = vadd.f32 %v997, %v1013
        %v1026 = vadd.f32 %v998, %v1009
        %v1027 = vadd.f32 %v999, %v1013
        %v1028 = vadd.f32 %v1000, %v1009
        %v1029 = vadd.f32 %v1001, %v1013
        %v1030 = vadd.f32 %v1002, %v1009
        %v1031 = vadd.f32 %v1003, %v1013
        %1032 = vst [vmem:[%s309] sm:$0xff] %v1016
        %1033 = vst [vmem:[%s309 + $0x8] sm:$0xff] %v1017
        %1034 = vst [vmem:[%s309 + $0x10] sm:$0xff] %v1018
        %1035 = vst [vmem:[%s309 + $0x18] sm:$0xff] %v1019
        %1036 = vst [vmem:[%s309 + $0x20] sm:$0xff] %v1020
        %1037 = vst [vmem:[%s309 + $0x28] sm:$0xff] %v1021
        %1038 = vst [vmem:[%s309 + $0x30] sm:$0xff] %v1022
        %1039 = vst [vmem:[%s309 + $0x38] sm:$0xff] %v1023
        %1040 = vst [vmem:[%s309 + $0x40] sm:$0xff] %v1024
        %1041 = vst [vmem:[%s309 + $0x48] sm:$0xff] %v1025
        %1042 = vst [vmem:[%s309 + $0x50] sm:$0xff] %v1026
        %1043 = vst [vmem:[%s309 + $0x58] sm:$0xff] %v1027
        %1044 = vst [vmem:[%s309 + $0x60] sm:$0xff] %v1028
        %1045 = vst [vmem:[%s309 + $0x68] sm:$0xff] %v1029
        %1046 = vst [vmem:[%s309 + $0x70] sm:$0xff] %v1030
        %1047 = vst [vmem:[%s309 + $0x78] sm:$0xff] %v1031
      $region48: #{_ffn_impl.1} parent=39 // pred_fallthru
        _
      %s1048 = smul.u32 8, %s20
      %p1049 = scmp.lt.s32.totalorder %s1048, 15
      %s1050 = scalar_select %p1049, %s1048, 15
      %s1051 = smul.addr %s1050, 2
      %s1052 = smul.addr %s1051, 8
      %s1053 = scalar_lea.vmem %s5, %s1052
      // Predicated region
      $region49: #{_ffn_impl.1} parent=39 // pred_check
        %p1054 = pneg %p171
      $region50: #{_ffn_impl.1} parent=39 // pred_check_branch
        %1056 = sbr.rel (%p1054) target = $region52
      $region51: #{_ffn_impl.1} parent=39 // pred_region
        %s1057 = smul.u32 8, %s20
      $region52: #{_ffn_impl.1} parent=39 // pred_fallthru
        _
    $region40: #{_ffn_impl.1} parent=5 // pred_fallthru
      _
    %p1058 = scmp.le.s32.totalorder 2, %s11
    // Predicated region
    $region53: #{_ffn_impl.1} parent=5 // pred_check
      %p1059 = pneg %p1058
    $region54: #{_ffn_impl.1} parent=5 // pred_check_branch
      %1061 = sbr.rel (%p1059) target = $region56
    $region55: #{_ffn_impl.1} parent=5 // pred_region
      %s1062 = ssub.s32 %s11, 2
      // Predicated region
      $region57: #{_ffn_impl.1} parent=55 // pred_check
        %p1063 = pneg %p177
      $region58: #{_ffn_impl.1} parent=55 // pred_check_branch
        %1065 = sbr.rel (%p1063) target = $region60
      $region59: #{_ffn_impl.1} parent=55 // pred_region
        %s1066 = smul.u32 8, %s22
        %p1067 = scmp.lt.s32.totalorder %s1066, 15
        %s1068 = scalar_select %p1067, %s1066, 15
        %s1069 = smul.addr %s1068, 2
        %s1070 = smul.addr %s1069, 8
        %s1071 = scalar_lea.vmem %s5, %s1070
      $region60: #{_ffn_impl.1} parent=55 // pred_fallthru
        _
    $region56: #{_ffn_impl.1} parent=5 // pred_fallthru
      _
  $region6: #{_ffn_impl.1} parent=0 // loop_footer
    %s15 = sadd.s32 1, %s11
  $region7: #{_ffn_impl.1} parent=0 // loop_footer_branch
    %10 = sbr.rel target = $region3
  $region8: #{_ffn_impl.1} parent=0 // loop_exit
    _

</llo_original>
